<compile_context>
chip_gen: v5e
topology: v5e:2x2
jax: 0.10.0
libtpu: 0.0.40
codegen_flags: <defaults>
</compile_context>

<pallas_src>
import jax
import jax.numpy as jnp
from jax.experimental import pallas as pl
from jax.experimental.pallas import tpu as pltpu


def _sinkhorn_net_kernel(x_ref, w1_ref, b1_ref, w2_ref, b2_ref, o_ref):
    # x_ref : (1, Nt)   flattened inputs, N on the lane axis
    # w1_ref: (L, 1)    linear1.weight  (torch shape (L, 1))
    # b1_ref: (L, 1)    linear1.bias
    # w2_ref: (D, L)    linear2.weight  (torch shape (D, L))
    # b2_ref: (D, 1)    linear2.bias
    # o_ref : (D, Nt)   transposed output tile (lane-dense)
    x = x_ref[...]                                              # (1, Nt)
    # Layer 1: K=1 outer product -> VPU broadcast multiply-add + ReLU.
    h = jnp.maximum(w1_ref[...] * x + b1_ref[...], 0.0)         # (L, Nt)
    # (dropout d1: identity at inference)
    # Layer 2: (D, L) @ (L, Nt) on the MXU, f32 accumulate, + bias.
    y = jnp.dot(w2_ref[...], h, preferred_element_type=jnp.float32) + b2_ref[...]
    # (dropout d2: identity at inference)
    o_ref[...] = y.astype(o_ref.dtype)                          # (D, Nt)


def sinkhorn_net_forward(x, w1, b1, w2, b2, output_dim, *, tile_n=1024):
    """x: (batch, seq) f32. w1:(L,1), b1:(L,), w2:(D,L), b2:(D,) (torch layouts).
    Returns (-1, output_dim, output_dim) exactly like the PyTorch module."""
    batch, seq = x.shape
    n = batch * seq
    latent_dim = w1.shape[0]
    d = output_dim
    # PyTorch's final reshape silently requires batch*seq % output_dim == 0.
    assert n % d == 0, f"batch*seq ({n}) must be divisible by output_dim ({d})"

    # Lane tile: multiple of 128, no bigger than needed.
    tn = max(128, min(tile_n, ((n + 127) // 128) * 128))
    n_pad = ((n + tn - 1) // tn) * tn

    x_flat = x.reshape(-1).astype(jnp.float32)
    x_row = jnp.pad(x_flat, (0, n_pad - n)).reshape(1, n_pad)   # (1, n_pad)

    w1_c = w1.reshape(latent_dim, 1).astype(jnp.float32)        # (L, 1)
    b1_c = b1.reshape(latent_dim, 1).astype(jnp.float32)        # (L, 1)
    w2_c = w2.astype(jnp.float32)                               # (D, L)
    b2_c = b2.reshape(d, 1).astype(jnp.float32)                 # (D, 1)

    grid = (n_pad // tn,)
    y_t = pl.pallas_call(
        _sinkhorn_net_kernel,
        out_shape=jax.ShapeDtypeStruct((d, n_pad), jnp.float32),
        grid=grid,
        in_specs=[
            pl.BlockSpec((1, tn), lambda i: (0, i)),                   # x (streamed)
            pl.BlockSpec((latent_dim, 1), lambda i: (0, 0)),           # w1 (resident)
            pl.BlockSpec((latent_dim, 1), lambda i: (0, 0)),           # b1 (resident)
            pl.BlockSpec((d, latent_dim), lambda i: (0, 0)),           # w2 (resident)
            pl.BlockSpec((d, 1), lambda i: (0, 0)),                    # b2 (resident)
        ],
        out_specs=pl.BlockSpec((d, tn), lambda i: (0, i)),
        compiler_params=pltpu.CompilerParams(
            dimension_semantics=("parallel",),
        ),
    )(x_row, w1_c, b1_c, w2_c, b2_c)

    # Back to PyTorch layout: (N, D) rows, then (-1, D, D).
    y = y_t[:, :n].T
    return y.reshape(-1, d, d)


def _init_linear_params(key, in_features, out_features):
    """Deterministic init mimicking torch.nn.Linear default (uniform +/- 1/sqrt(fan_in))."""
    kw, kb = jax.random.split(key)
    bound = 1.0 / jnp.sqrt(jnp.float32(in_features))
    w = jax.random.uniform(kw, (out_features, in_features), jnp.float32, -bound, bound)
    b = jax.random.uniform(kb, (out_features,), jnp.float32, -bound, bound)
    return w, b


def _reference_forward(x, w1, b1, w2, b2, output_dim):
    n = x.size
    xc = x.reshape(n, 1).astype(jnp.float32)
    h = jnp.maximum(xc @ w1.T + b1, 0.0)
    y = h @ w2.T + b2
    return y.reshape(-1, output_dim, output_dim)


if __name__ == "__main__":
    latent_dim = 32
    output_dim = 8          # seq_len == output_dim (as the module docstring requires)
    batch = 2
    dropout_prob = 0.1      # unused at inference (dropout = identity)

    key = jax.random.PRNGKey(0)
    k_x, k_l1, k_l2, k_x2 = jax.random.split(key, 4)

    w1, b1 = _init_linear_params(k_l1, 1, latent_dim)            # Linear(1, latent)
    w2, b2 = _init_linear_params(k_l2, latent_dim, output_dim)   # Linear(latent, output_dim)

    # Small case (single grid step).
    x = jax.random.normal(k_x, (batch, output_dim), dtype=jnp.float32)
    out = sinkhorn_net_forward(x, w1, b1, w2, b2, output_dim)
    out = jax.block_until_ready(out)
    ref = _reference_forward(x, w1, b1, w2, b2, output_dim)
    assert out.shape == (batch, output_dim, output_dim), out.shape
    assert jnp.allclose(out, ref, atol=1e-5, rtol=1e-5), "mismatch vs reference (small)"

    # Slightly larger case to exercise the multi-tile grid + padding path.
    x2 = jax.random.normal(k_x2, (300, output_dim), dtype=jnp.float32)  # n=2400 -> 3 tiles of 1024 (padded)
    out2 = sinkhorn_net_forward(x2, w1, b1, w2, b2, output_dim)
    out2 = jax.block_until_ready(out2)
    ref2 = _reference_forward(x2, w1, b1, w2, b2, output_dim)
    assert out2.shape == (300, output_dim, output_dim), out2.shape
    assert jnp.allclose(out2, ref2, atol=1e-5, rtol=1e-5), "mismatch vs reference (grid)"

    print("KERNEL_OK")
</pallas_src>

<mosaic_0001>
module attributes {stable_mosaic.version = 11 : i64} {
  func.func @_sinkhorn_net_kernel(%arg0: i32, %arg1: memref<1x128xf32, #tpu.memory_space<vmem>>, %arg2: memref<32x1xf32, #tpu.memory_space<vmem>>, %arg3: memref<32x1xf32, #tpu.memory_space<vmem>>, %arg4: memref<8x32xf32, #tpu.memory_space<vmem>>, %arg5: memref<8x1xf32, #tpu.memory_space<vmem>>, %arg6: memref<8x128xf32, #tpu.memory_space<vmem>>) attributes {dimension_semantics = [#tpu.dimension_semantics<parallel>], iteration_bounds = array<i64: 1>, scalar_prefetch = 0 : i64, scratch_operands = 0 : i64, tpu.core_type = #tpu.core_type<tc>, window_params = [{transform_indices = @transform_0, window_bounds = array<i64: 1, 128>}, {pipeline_mode = #tpu.pipeline_mode<synchronous>, transform_indices = @transform_1, window_bounds = array<i64: 32, 1>}, {pipeline_mode = #tpu.pipeline_mode<synchronous>, transform_indices = @transform_2, window_bounds = array<i64: 32, 1>}, {pipeline_mode = #tpu.pipeline_mode<synchronous>, transform_indices = @transform_3, window_bounds = array<i64: 8, 32>}, {pipeline_mode = #tpu.pipeline_mode<synchronous>, transform_indices = @transform_4, window_bounds = array<i64: 8, 1>}, {transform_indices = @transform_5, window_bounds = array<i64: 8, 128>}]} {
    %c0 = arith.constant 0 : index
    %c0_0 = arith.constant 0 : index
    %0 = vector.load %arg1[%c0, %c0_0] : memref<1x128xf32, #tpu.memory_space<vmem>>, vector<1x128xf32>
    %c0_1 = arith.constant 0 : index
    %c0_2 = arith.constant 0 : index
    %1 = vector.load %arg2[%c0_1, %c0_2] : memref<32x1xf32, #tpu.memory_space<vmem>>, vector<32x1xf32>
    %2 = vector.broadcast %1 : vector<32x1xf32> to vector<32x128xf32>
    %3 = vector.broadcast %0 : vector<1x128xf32> to vector<32x128xf32>
    %4 = arith.mulf %2, %3 : vector<32x128xf32>
    %c0_3 = arith.constant 0 : index
    %c0_4 = arith.constant 0 : index
    %5 = vector.load %arg3[%c0_3, %c0_4] : memref<32x1xf32, #tpu.memory_space<vmem>>, vector<32x1xf32>
    %6 = vector.broadcast %5 : vector<32x1xf32> to vector<32x128xf32>
    %7 = arith.addf %4, %6 : vector<32x128xf32>
    %cst = arith.constant 0.000000e+00 : f32
    %8 = vector.broadcast %cst : f32 to vector<32x128xf32>
    %9 = arith.maximumf %7, %8 : vector<32x128xf32>
    %c0_5 = arith.constant 0 : index
    %c0_6 = arith.constant 0 : index
    %10 = vector.load %arg4[%c0_5, %c0_6] : memref<8x32xf32, #tpu.memory_space<vmem>>, vector<8x32xf32>
    %cst_7 = arith.constant dense<0.000000e+00> : vector<8x128xf32>
    %11 = tpu.matmul %10, %9, %cst_7 {dimension_numbers = #tpu.dot_dimension_numbers<[1], [0], [0], [1], [0, 0, 1, 1], [], []>} : vector<8x32xf32>, vector<32x128xf32>, vector<8x128xf32> -> vector<8x128xf32>
    %c0_8 = arith.constant 0 : index
    %c0_9 = arith.constant 0 : index
    %12 = vector.load %arg5[%c0_8, %c0_9] : memref<8x1xf32, #tpu.memory_space<vmem>>, vector<8x1xf32>
    %13 = vector.broadcast %12 : vector<8x1xf32> to vector<8x128xf32>
    %14 = arith.addf %11, %13 : vector<8x128xf32>
    %c0_10 = arith.constant 0 : index
    %c0_11 = arith.constant 0 : index
    %15 = vector.load %arg6[%c0_10, %c0_11] : memref<8x128xf32, #tpu.memory_space<vmem>>, vector<8x128xf32>
    tpu.vector_store %arg6[%c0_10, %c0_11], %14 {strides = array<i32>} : memref<8x128xf32, #tpu.memory_space<vmem>>, vector<8x128xf32>,
    return
  }
  func.func @transform_0(%arg0: i32) -> (i32, i32) {
    %c0_i32 = arith.constant 0 : i32
    %c0_i32_0 = arith.constant 0 : i32
    return %c0_i32, %arg0 : i32, i32
  }
  func.func @transform_1(%arg0: i32) -> (i32, i32) {
    %c0_i32 = arith.constant 0 : i32
    %c0_i32_0 = arith.constant 0 : i32
    %c0_i32_1 = arith.constant 0 : i32
    return %c0_i32, %c0_i32_0 : i32, i32
  }
  func.func @transform_2(%arg0: i32) -> (i32, i32) {
    %c0_i32 = arith.constant 0 : i32
    %c0_i32_0 = arith.constant 0 : i32
    %c0_i32_1 = arith.constant 0 : i32
    return %c0_i32, %c0_i32_0 : i32, i32
  }
  func.func @transform_3(%arg0: i32) -> (i32, i32) {
    %c0_i32 = arith.constant 0 : i32
    %c0_i32_0 = arith.constant 0 : i32
    %c0_i32_1 = arith.constant 0 : i32
    return %c0_i32, %c0_i32_0 : i32, i32
  }
  func.func @transform_4(%arg0: i32) -> (i32, i32) {
    %c0_i32 = arith.constant 0 : i32
    %c0_i32_0 = arith.constant 0 : i32
    %c0_i32_1 = arith.constant 0 : i32
    return %c0_i32, %c0_i32_0 : i32, i32
  }
  func.func @transform_5(%arg0: i32) -> (i32, i32) {
    %c0_i32 = arith.constant 0 : i32
    %c0_i32_0 = arith.constant 0 : i32
    return %c0_i32, %arg0 : i32, i32
  }
}

</mosaic_0001>

<llo_original>
// kernel: tpu_custom_call.1
$region0: #{tpu_custom_call.1}
  #allocation0 [shape = 'u32[]', space=smem, size = 0x4, offset = 0x4, fixed_abs, tag = 'smem constant byte address 0x4 - core index']
  #allocation1 [shape = 'u32[72,128]{1,0:T(1,128)}', space=vmem, size = 0x9000, scoped, tag = 'internal scratch']
  %s0 = inlined_call_operand.vmem [shape: f32[1,128], index: 0, kind: input, shape index: {}]
  %s1 = inlined_call_operand.vmem [shape: f32[32,1], index: 1, kind: input, shape index: {}]
  %s2 = inlined_call_operand.vmem [shape: f32[32,1], index: 2, kind: input, shape index: {}]
  %s3 = inlined_call_operand.vmem [shape: f32[8,32], index: 3, kind: input, shape index: {}]
  %s4 = inlined_call_operand.vmem [shape: f32[8,1], index: 4, kind: input, shape index: {}]
  %s5 = inlined_call_operand.hbm [shape: f32[8,128], index: 5, kind: output, shape index: {}]
  %s6 = sld [smem:[#allocation0]]
  $region30: #{tpu_custom_call.1} parent=0
    _
  %s8 = ssub.s32 1, %s6
  %s9 = scalar_select 0, %s8, %s6
  $region1: #{tpu_custom_call.1} parent=0
    #allocation2 [shape = 'u8[4096]{0}', space=vmem, size = 0x1000, scoped, tag = 'output window, operand 0, single buffered']
    #allocation3 [shape = 's32[1]{0}', space=sflag, size = 0x4, scoped, tag = 'scoped memory for tpu_custom_call.1']
    %10 = vsyncpa [#allocation3], 0
    // Predicated region
    $region2: #{tpu_custom_call.1} parent=1 // pred_check
      _
    $region3: #{tpu_custom_call.1} parent=1 // pred_check_branch
      %12 = sbr.rel (0) target = $region5
    $region4: #{tpu_custom_call.1} parent=1 // pred_region
      _
    $region5: #{tpu_custom_call.1} parent=1 // pred_fallthru
      _
    // Predicated region
    $region6: #{tpu_custom_call.1} parent=1 // pred_check
      _
    $region7: #{tpu_custom_call.1} parent=1 // pred_check_branch
      %14 = sbr.rel (0) target = $region9
    $region8: #{tpu_custom_call.1} parent=1 // pred_region
      _
    $region9: #{tpu_custom_call.1} parent=1 // pred_fallthru
      _
    // Predicated region
    $region10: #{tpu_custom_call.1} parent=1 // pred_check
      _
    $region11: #{tpu_custom_call.1} parent=1 // pred_check_branch
      %16 = sbr.rel (0) target = $region13
    $region12: #{tpu_custom_call.1} parent=1 // pred_region
      _
    $region13: #{tpu_custom_call.1} parent=1 // pred_fallthru
      _
    // Predicated region
    $region14: #{tpu_custom_call.1} parent=1 // pred_check
      _
    $region15: #{tpu_custom_call.1} parent=1 // pred_check_branch
      %18 = sbr.rel (0) target = $region17
    $region16: #{tpu_custom_call.1} parent=1 // pred_region
      _
    $region17: #{tpu_custom_call.1} parent=1 // pred_fallthru
      _
    // Predicated region
    $region18: #{tpu_custom_call.1} parent=1 // pred_check
      _
    $region19: #{tpu_custom_call.1} parent=1 // pred_check_branch
      %20 = sbr.rel (0) target = $region21
    $region20: #{tpu_custom_call.1} parent=1 // pred_region
      _
    $region21: #{tpu_custom_call.1} parent=1 // pred_fallthru
      _
    %v21 = vld [vmem:[%s0] sm:$0x1]
    %v22 = vld [vmem:[%s1] sm:$0xff]
    %v23 = vld [vmem:[%s1 + $0x8] sm:$0xff]
    %v24 = vld [vmem:[%s1 + $0x10] sm:$0xff]
    %v25 = vld [vmem:[%s1 + $0x18] sm:$0xff]
    %27 = vset.pattern.permute.xlu0 0
    %28 = vperm.xlu0 %27, %v22
    %v29 = vpop.permute.xlu0 %28
    %32 = vset.pattern.permute.xlu0 0
    %33 = vperm.xlu0 %32, %v23
    %v34 = vpop.permute.xlu0 %33
    %37 = vset.pattern.permute.xlu0 0
    %38 = vperm.xlu0 %37, %v24
    %v39 = vpop.permute.xlu0 %38
    %42 = vset.pattern.permute.xlu0 0
    %43 = vperm.xlu0 %42, %v25
    %v44 = vpop.permute.xlu0 %43
    %v47 = vperm.slane %v21, 0
    %v49 = vmul.f32 %v29, %v47
    %v50 = vmul.f32 %v34, %v47
    %v51 = vmul.f32 %v39, %v47
    %v52 = vmul.f32 %v44, %v47
    %v53 = vld [vmem:[%s2] sm:$0xff]
    %v54 = vld [vmem:[%s2 + $0x8] sm:$0xff]
    %v55 = vld [vmem:[%s2 + $0x10] sm:$0xff]
    %v56 = vld [vmem:[%s2 + $0x18] sm:$0xff]
    %58 = vset.pattern.permute.xlu0 0
    %59 = vperm.xlu0 %58, %v53
    %v60 = vpop.permute.xlu0 %59
    %63 = vset.pattern.permute.xlu0 0
    %64 = vperm.xlu0 %63, %v54
    %v65 = vpop.permute.xlu0 %64
    %68 = vset.pattern.permute.xlu0 0
    %69 = vperm.xlu0 %68, %v55
    %v70 = vpop.permute.xlu0 %69
    %73 = vset.pattern.permute.xlu0 0
    %74 = vperm.xlu0 %73, %v56
    %v75 = vpop.permute.xlu0 %74
    %v77 = vadd.f32 %v49, %v60
    %v78 = vadd.f32 %v50, %v65
    %v79 = vadd.f32 %v51, %v70
    %v80 = vadd.f32 %v52, %v75
    %v81 = vmax.f32 %v77, 0.0
    %v82 = vmax.f32 %v78, 0.0
    %v83 = vmax.f32 %v79, 0.0
    %v84 = vmax.f32 %v80, 0.0
    %v85 = vld [vmem:[%s3] sm:$0xff]
    %v86 = vld [vmem:[%s4] sm:$0xff]
    %88 = vset.pattern.permute.xlu0 0
    %89 = vperm.xlu0 %88, %v86
    %v90 = vpop.permute.xlu0 %89
    %vm92 = vcmask 261120
    %v94 = vsel %vm92, %v85, 0
    %96 = vmatpush.msra.mxu0 0.0
    %97 = vmatpush.msra.mxu0 0.0
    %98 = vmatpush.msra.mxu0 0.0
    %99 = vmatpush.msra.mxu0 0.0
    %100 = vmatpush.msra.mxu0 0.0
    %101 = vmatpush.msra.mxu0 0.0
    %102 = vmatpush.msra.mxu0 0.0
    %103 = vmatpush.msra.mxu0 0.0
    %104 = vmatpush.msra.mxu0 0.0
    %105 = vmatpush.msra.mxu0 0.0
    %106 = vmatpush.msra.mxu0 0.0
    %107 = vmatpush.msra.mxu0 0.0
    %108 = vmatpush.msra.mxu0 %v84
    %109 = vmatpush.msra.mxu0 %v83
    %110 = vmatpush.msra.mxu0 %v82
    %111 = vmatpush.msra.mxu0 %v81
    %112 = vmatmul.f32.gmra.mxu0 %v94
    %v113 = vpop.f32.mrf.mxu0
    %v114 = vadd.f32 %v90, %v113
    %115 = vdwg.mxu0
    %116 = vst [vmem:[#allocation2] sm:$0xff] %v114
    // Predicated region
    $region22: #{tpu_custom_call.1} parent=1 // pred_check
      _
    $region23: #{tpu_custom_call.1} parent=1 // pred_check_branch
      %118 = sbr.rel (0) target = $region25
    $region24: #{tpu_custom_call.1} parent=1 // pred_region
      %120 = vsyncadd [#allocation3], 0
      %s122 = sshll.u32 [#allocation2], 4
      %s123 = int_to_ptr.vmem [resolvable:$true] %s122
      %s124 = sshll.u32 %s5, 4
      %s125 = int_to_ptr.hbm [resolvable:$true] %s124
      %127 = dma.vmem_to_hbm [thread:$0]  %s123, 128, %s125, [#allocation3]
    $region25: #{tpu_custom_call.1} parent=1 // pred_fallthru
      _
    // Predicated region
    $region26: #{tpu_custom_call.1} parent=1 // pred_check
      _
    $region27: #{tpu_custom_call.1} parent=1 // pred_check_branch
      %129 = sbr.rel (0) target = $region29
    $region28: #{tpu_custom_call.1} parent=1 // pred_region
      %131 = dma.done [#allocation3], 128
    $region29: #{tpu_custom_call.1} parent=1 // pred_fallthru
      _
    %132 = vsyncpa [#allocation3], 1

</llo_original>
